<compile_context>
chip_gen: v6e
topology: v6e:2x2x1
jax: 0.10.0
libtpu: 0.0.40
codegen_flags: <defaults>
</compile_context>

<pallas_src>
import jax
import jax.numpy as jnp
from jax import lax
from jax.experimental import pallas as pl
from jax.experimental.pallas import tpu as pltpu

LN_EPS = 1e-5  # PyTorch nn.LayerNorm default


def addnorm_kernel(x_ref, y_ref, w_ref, b_ref, o_ref):
    # x_ref, y_ref, o_ref: (tile_rows, hidden); w_ref, b_ref: (1, hidden)
    x = x_ref[...].astype(jnp.float32)
    y = y_ref[...].astype(jnp.float32)
    z = y + x  # dropout(Y) + X, eval-mode dropout == identity

    # Two-pass statistics (matches PyTorch LayerNorm numerics; no
    # catastrophic cancellation when |mean| >> std).
    mean = jnp.mean(z, axis=-1, keepdims=True)
    zc = z - mean
    var = jnp.mean(zc * zc, axis=-1, keepdims=True)
    inv = lax.rsqrt(var + LN_EPS)  # EUP rsqrt

    w = w_ref[...].astype(jnp.float32)
    b = b_ref[...].astype(jnp.float32)
    o_ref[...] = ((zc * inv) * w + b).astype(o_ref.dtype)


def _tpu_vmem_capacity_bytes():
    try:
        return int(pltpu.get_tpu_info().vmem_capacity_bytes)
    except Exception:
        return 64 << 20  # conservative fallback: assume v7x-sized VMEM


def _sublane(itemsize):
    # Second-to-last block dim granularity: 8 for 4-byte, 16 for 2-byte, 32 for 1-byte.
    return max(8, 32 // max(int(itemsize), 1))


def _round_up(n, m):
    return ((n + m - 1) // m) * m


def _plan_tiles(rows, hidden, itemsize, tile_rows=None):
    """Pick (tile_rows, vmem_limit_bytes) for the row-tiled pipeline.

    Footprint model (all sizes in bytes of one block = tile_rows*hidden*itemsize):
      3 streams (x, y, out) x 2 pipeline buffers            -> 6 * block
      ~3 block-sized f32 temporaries (z, upcasts of x / y)  -> 3 * block * (4/itemsize)
    Keep footprint <= 75% of the scoped limit; scoped limit itself is capped
    at 75% of physical VMEM so surrounding XLA fusions keep headroom.
    """
    sub = _sublane(itemsize)
    vmem_cap = _tpu_vmem_capacity_bytes()
    limit_cap = max(32 << 20, (vmem_cap * 3) // 4)  # 96 MiB v5e/v6e, 48 MiB v7x

    f32_factor = max(1, 4 // int(itemsize))
    denom = 6 + 3 * f32_factor  # blocks of pipeline buffers + f32 temps

    if tile_rows is None:
        # ~4 MiB blocks on all generations (review: already ~86% of roofline
        # on v5e/v6e; fixes the 2 MiB under-amortization on v7x).
        block_budget = min(4 << 20, ((limit_cap * 3) // 4) // denom)
        block_budget = max(block_budget, 512 << 10)
        tile_rows = block_budget // (hidden * itemsize)
        tile_rows = max(sub, (tile_rows // sub) * sub)
        tile_rows = min(tile_rows, _round_up(rows, sub))
    else:
        tile_rows = max(sub, (int(tile_rows) // sub) * sub)
        tile_rows = min(tile_rows, _round_up(rows, sub))

    # Megacore / 2-TC (v7x): make sure the row loop has >= 2 steps so the
    # "parallel" grid axis can shard across TensorCores.
    if pl.cdiv(rows, tile_rows) < 2 and rows > sub:
        tile_rows = max(sub, _round_up(pl.cdiv(rows, 2), sub))

    block_bytes = tile_rows * hidden * itemsize
    footprint = (6 * block_bytes                       # 3 streams x 2 buffers
                 + 3 * block_bytes * f32_factor        # f32 temporaries
                 + 4 * hidden * itemsize)              # weight/bias (double-buffered)
    vmem_limit = int(min(limit_cap, max(32 << 20, footprint + footprint // 4)))
    return tile_rows, vmem_limit


def add_norm(x, y, weight, bias, *, tile_rows=None, donate_x=False):
    """x, y: (..., hidden); weight, bias: (hidden,). Eval-mode AddNorm.

    If `donate_x=True`, the X buffer is aliased to the output (saves an HBM
    allocation) — only use when the caller no longer needs X.
    """
    assert x.shape == y.shape
    lead = x.shape[:-1]
    H = x.shape[-1]
    rows = 1
    for d in lead:
        rows *= d

    x2 = x.reshape(rows, H)
    y2 = y.reshape(rows, H)
    w2 = weight.reshape(1, H)
    b2 = bias.reshape(1, H)

    itemsize = jnp.dtype(x.dtype).itemsize
    tile_rows, vmem_limit = _plan_tiles(rows, H, itemsize, tile_rows)

    # No padding: Pallas masks the ragged last block (OOB reads are per-row
    # junk that stays within its own row; OOB writes are dropped).
    grid = (pl.cdiv(rows, tile_rows),)

    out2 = pl.pallas_call(
        addnorm_kernel,
        out_shape=jax.ShapeDtypeStruct((rows, H), x.dtype),
        grid_spec=pltpu.PrefetchScalarGridSpec(
            num_scalar_prefetch=0,
            grid=grid,
            in_specs=[
                pl.BlockSpec((tile_rows, H), lambda i: (i, 0)),
                pl.BlockSpec((tile_rows, H), lambda i: (i, 0)),
                pl.BlockSpec((1, H), lambda i: (0, 0)),
                pl.BlockSpec((1, H), lambda i: (0, 0)),
            ],
            out_specs=pl.BlockSpec((tile_rows, H), lambda i: (i, 0)),
        ),
        compiler_params=pltpu.CompilerParams(
            # Independent row tiles -> parallel (megacore / 2-TC sharding on v7x).
            dimension_semantics=("parallel",),
            vmem_limit_bytes=vmem_limit,
        ),
        input_output_aliases={0: 0} if donate_x else {},
    )(x2, y2, w2, b2)

    return out2.reshape(*lead, H)


def add_norm_ref(x, y, weight, bias):
    z = (y.astype(jnp.float32) + x.astype(jnp.float32))
    mean = jnp.mean(z, axis=-1, keepdims=True)
    var = jnp.mean((z - mean) ** 2, axis=-1, keepdims=True)
    return (((z - mean) / jnp.sqrt(var + LN_EPS)) * weight + bias).astype(x.dtype)


if __name__ == "__main__":
    # Small but lane-aligned hidden size (multiple of 128) so the demo
    # exercises the layout the kernel sees in production.
    batch, seq, hidden = 2, 8, 128
    key = jax.random.PRNGKey(0)
    kx, ky, kw, kb = jax.random.split(key, 4)
    x = jax.random.normal(kx, (batch, seq, hidden), dtype=jnp.float32)
    y = jax.random.normal(ky, (batch, seq, hidden), dtype=jnp.float32)
    # Non-trivial affine params (PyTorch default init would be ones/zeros).
    weight = 1.0 + 0.1 * jax.random.normal(kw, (hidden,), dtype=jnp.float32)
    bias = 0.1 * jax.random.normal(kb, (hidden,), dtype=jnp.float32)

    out = jax.block_until_ready(add_norm(x, y, weight, bias))
    ref = add_norm_ref(x, y, weight, bias)
    assert out.shape == (batch, seq, hidden)
    assert jnp.allclose(out, ref, atol=1e-5, rtol=1e-5)

    # Ragged-rows path (rows = 15, not a multiple of the 8-row sublane tile):
    # no padding / slicing — the last block is masked by Pallas.
    b2_, s2_ = 3, 5
    x2_ = jax.random.normal(kx, (b2_, s2_, hidden), dtype=jnp.float32)
    y2_ = jax.random.normal(ky, (b2_, s2_, hidden), dtype=jnp.float32)
    out2_ = jax.block_until_ready(add_norm(x2_, y2_, weight, bias, tile_rows=8))
    ref2_ = add_norm_ref(x2_, y2_, weight, bias)
    assert out2_.shape == (b2_, s2_, hidden)
    assert jnp.allclose(out2_, ref2_, atol=1e-5, rtol=1e-5)

    # bf16 path (sublane granularity 16, f32 temporaries tracked in budget).
    xb = x.astype(jnp.bfloat16)
    yb = y.astype(jnp.bfloat16)
    outb = jax.block_until_ready(add_norm(xb, yb, weight, bias))
    refb = add_norm_ref(xb, yb, weight, bias)
    assert outb.dtype == jnp.bfloat16
    assert jnp.allclose(outb.astype(jnp.float32), refb.astype(jnp.float32),
                        atol=2e-2, rtol=2e-2)

    print("KERNEL_OK")
</pallas_src>

<mosaic_0001>
module attributes {stable_mosaic.version = 11 : i64} {
  func.func @addnorm_kernel(%arg0: i32, %arg1: memref<8x128xf32, #tpu.memory_space<vmem>>, %arg2: memref<8x128xf32, #tpu.memory_space<vmem>>, %arg3: memref<1x128xf32, #tpu.memory_space<vmem>>, %arg4: memref<1x128xf32, #tpu.memory_space<vmem>>, %arg5: memref<8x128xf32, #tpu.memory_space<vmem>>) attributes {dimension_semantics = [#tpu.dimension_semantics<parallel>], iteration_bounds = array<i64: 2>, scalar_prefetch = 0 : i64, scratch_operands = 0 : i64, tpu.core_type = #tpu.core_type<tc>, window_params = [{transform_indices = @transform_0, window_bounds = array<i64: 8, 128>}, {transform_indices = @transform_1, window_bounds = array<i64: 8, 128>}, {pipeline_mode = #tpu.pipeline_mode<synchronous>, transform_indices = @transform_2, window_bounds = array<i64: 1, 128>}, {pipeline_mode = #tpu.pipeline_mode<synchronous>, transform_indices = @transform_3, window_bounds = array<i64: 1, 128>}, {transform_indices = @transform_4, window_bounds = array<i64: 8, 128>}]} {
    %c0 = arith.constant 0 : index
    %c0_0 = arith.constant 0 : index
    %0 = vector.load %arg1[%c0, %c0_0] : memref<8x128xf32, #tpu.memory_space<vmem>>, vector<8x128xf32>
    %c0_1 = arith.constant 0 : index
    %c0_2 = arith.constant 0 : index
    %1 = vector.load %arg2[%c0_1, %c0_2] : memref<8x128xf32, #tpu.memory_space<vmem>>, vector<8x128xf32>
    %2 = arith.addf %1, %0 : vector<8x128xf32>
    %cst = arith.constant dense<0.000000e+00> : vector<8xf32>
    %3 = vector.multi_reduction <add>, %2, %cst [1] : vector<8x128xf32> to vector<8xf32>
    %4 = vector.shape_cast %3 : vector<8xf32> to vector<8x1xf32>
    %cst_3 = arith.constant 1.280000e+02 : f32
    %5 = vector.broadcast %cst_3 : f32 to vector<8x1xf32>
    %6 = arith.divf %4, %5 : vector<8x1xf32>
    %7 = vector.broadcast %6 : vector<8x1xf32> to vector<8x128xf32>
    %8 = arith.subf %2, %7 : vector<8x128xf32>
    %9 = arith.mulf %8, %8 : vector<8x128xf32>
    %cst_4 = arith.constant dense<0.000000e+00> : vector<8xf32>
    %10 = vector.multi_reduction <add>, %9, %cst_4 [1] : vector<8x128xf32> to vector<8xf32>
    %11 = vector.shape_cast %10 : vector<8xf32> to vector<8x1xf32>
    %cst_5 = arith.constant 1.280000e+02 : f32
    %12 = vector.broadcast %cst_5 : f32 to vector<8x1xf32>
    %13 = arith.divf %11, %12 : vector<8x1xf32>
    %cst_6 = arith.constant 9.99999974E-6 : f32
    %14 = vector.broadcast %cst_6 : f32 to vector<8x1xf32>
    %15 = arith.addf %13, %14 : vector<8x1xf32>
    %16 = math.rsqrt %15 : vector<8x1xf32>
    %c0_7 = arith.constant 0 : index
    %c0_8 = arith.constant 0 : index
    %17 = vector.load %arg3[%c0_7, %c0_8] : memref<1x128xf32, #tpu.memory_space<vmem>>, vector<1x128xf32>
    %c0_9 = arith.constant 0 : index
    %c0_10 = arith.constant 0 : index
    %18 = vector.load %arg4[%c0_9, %c0_10] : memref<1x128xf32, #tpu.memory_space<vmem>>, vector<1x128xf32>
    %19 = vector.broadcast %16 : vector<8x1xf32> to vector<8x128xf32>
    %20 = arith.mulf %8, %19 : vector<8x128xf32>
    %21 = vector.broadcast %17 : vector<1x128xf32> to vector<8x128xf32>
    %22 = arith.mulf %20, %21 : vector<8x128xf32>
    %23 = vector.broadcast %18 : vector<1x128xf32> to vector<8x128xf32>
    %24 = arith.addf %22, %23 : vector<8x128xf32>
    %c0_11 = arith.constant 0 : index
    %c0_12 = arith.constant 0 : index
    %25 = vector.load %arg5[%c0_11, %c0_12] : memref<8x128xf32, #tpu.memory_space<vmem>>, vector<8x128xf32>
    tpu.vector_store %arg5[%c0_11, %c0_12], %24 {strides = array<i32>} : memref<8x128xf32, #tpu.memory_space<vmem>>, vector<8x128xf32>,
    return
  }
  func.func @transform_0(%arg0: i32) -> (i32, i32) {
    %c0_i32 = arith.constant 0 : i32
    %c0_i32_0 = arith.constant 0 : i32
    return %arg0, %c0_i32 : i32, i32
  }
  func.func @transform_1(%arg0: i32) -> (i32, i32) {
    %c0_i32 = arith.constant 0 : i32
    %c0_i32_0 = arith.constant 0 : i32
    return %arg0, %c0_i32 : i32, i32
  }
  func.func @transform_2(%arg0: i32) -> (i32, i32) {
    %c0_i32 = arith.constant 0 : i32
    %c0_i32_0 = arith.constant 0 : i32
    %c0_i32_1 = arith.constant 0 : i32
    return %c0_i32, %c0_i32_0 : i32, i32
  }
  func.func @transform_3(%arg0: i32) -> (i32, i32) {
    %c0_i32 = arith.constant 0 : i32
    %c0_i32_0 = arith.constant 0 : i32
    %c0_i32_1 = arith.constant 0 : i32
    return %c0_i32, %c0_i32_0 : i32, i32
  }
  func.func @transform_4(%arg0: i32) -> (i32, i32) {
    %c0_i32 = arith.constant 0 : i32
    %c0_i32_0 = arith.constant 0 : i32
    return %arg0, %c0_i32 : i32, i32
  }
}

</mosaic_0001>

<llo_original>
// kernel: tpu_custom_call.1
$region0: #{tpu_custom_call.1}
  #allocation0 [shape = 'u32[]', space=smem, size = 0x4, offset = 0x4, fixed_abs, tag = 'smem constant byte address 0x4 - core index']
  #allocation1 [shape = 'u32[144,128]{1,0:T(1,128)}', space=vmem, size = 0x12000, scoped, tag = 'internal scratch']
  %s0 = inlined_call_operand.hbm [shape: f32[16,128], index: 0, kind: input, shape index: {}]
  %s1 = inlined_call_operand.hbm [shape: f32[16,128], index: 1, kind: input, shape index: {}]
  %s2 = inlined_call_operand.vmem [shape: f32[1,128], index: 2, kind: input, shape index: {}]
  %s3 = inlined_call_operand.vmem [shape: f32[1,128], index: 3, kind: input, shape index: {}]
  %s4 = inlined_call_operand.hbm [shape: f32[16,128], index: 4, kind: output, shape index: {}]
  %s5 = sld [smem:[#allocation0]]
  $region57: #{tpu_custom_call.1} parent=0
    _
  %s7 = ssub.s32 1, %s5
  %s8 = scalar_select 0, %s7, %s5
  $region1: #{tpu_custom_call.1} parent=0
    #allocation2 [shape = 'u8[8192]{0}', space=vmem, size = 0x2000, scoped, tag = 'input window, operand 0']
    #allocation3 [shape = 's32[2]{0}', space=sflag, size = 0x8, scoped, tag = 'scoped memory for tpu_custom_call.1']
    #allocation4 [shape = 's32[2]{0}', space=sflag, size = 0x8, scoped, tag = 'scoped memory for tpu_custom_call.1']
    #allocation5 [shape = 'u8[8192]{0}', space=vmem, size = 0x2000, scoped, tag = 'input window, operand 1']
    #allocation6 [shape = 's32[2]{0}', space=sflag, size = 0x8, scoped, tag = 'scoped memory for tpu_custom_call.1']
    #allocation7 [shape = 'u8[8192]{0}', space=vmem, size = 0x2000, scoped, tag = 'output window, operand 0']
    %9 = vsyncpa [#allocation3], 0
    %s10 = scalar_lea.sflag [#allocation3], 1
    %11 = vsyncpa %s10, 0
    %12 = vsyncpa [#allocation6], 0
    %s13 = scalar_lea.sflag [#allocation6], 1
    %14 = vsyncpa %s13, 0
    %15 = vsyncpa [#allocation4], 0
    %s16 = scalar_lea.sflag [#allocation4], 1
    %17 = vsyncpa %s16, 0
    loop: start=0, step=1, limit=4
    $region2: #{tpu_custom_call.1} parent=1 // loop_pre_header
      _
    $region3: #{tpu_custom_call.1} parent=1 // loop_header
      %s19 = sphi 0, %s23
      %p20 = scmp.ge.s32.totalorder %s19, 4
      %s29 = sphi 0, %s31
      %s32 = sphi 0, %s29
      %s33 = sphi 0, %s32
      %s49 = sphi 0, %s33
      %s55 = sphi 0, %s57
      %s58 = sphi 0, %s55
      %s59 = sphi 0, %s58
      %s75 = sphi 0, %s59
      %s79 = sphi 0, %s79
      %s81 = sphi 0, %s79
      %s82 = sphi 0, %s81
      %s96 = sphi 0, %s82
      %s100 = sphi 0, %s100
      %s102 = sphi 0, %s100
      %s103 = sphi 0, %s102
      %s117 = sphi 0, %s103
      %s123 = sphi 0, %s125
      %s126 = sphi 0, %s123
      %s127 = sphi 0, %s126
      %s143 = sphi 0, %s127
    $region4: #{tpu_custom_call.1} parent=1 // loop_header_branch
      %22 = sbr.rel (%p20) target = $region8
    $region5: #{tpu_custom_call.1} parent=1 // loop_body
      %s24 = ssub.s32 %s19, 1
      %s25 = ssub.s32 %s19, 2
      %s26 = sadd.s32 %s19, 1
      %s27 = ssub.s32 %s19, %s26
      %p28 = scmp.eq.s32.totalorder %s27, 0
      %s30 = sadd.s32 %s29, 1
      %s31 = scalar_select %p28, %s29, %s30
      %p34 = pneg %p28
      %p35 = scmp.eq.s32.totalorder %s19, 1
      %p36 = por %p34, %p35
      %p37 = scmp.ne.s32.totalorder %s29, %s32
      %p38 = scmp.eq.s32.totalorder %s19, 0
      %p39 = por %p37, %p38
      %p40 = scmp.ne.s32.totalorder %s29, %s32
      %p41 = scmp.eq.s32.totalorder %s24, 1
      %p42 = por %p40, %p41
      %p43 = scmp.ne.s32.totalorder %s32, %s33
      %p44 = scmp.eq.s32.totalorder %s24, 0
      %p45 = por %p43, %p44
      %p46 = scmp.ne.s32.totalorder %s32, %s33
      %p47 = scmp.eq.s32.totalorder %s25, 1
      %p48 = por %p46, %p47
      %p50 = scmp.ne.s32.totalorder %s33, %s49
      %p51 = scmp.eq.s32.totalorder %s25, 0
      %p52 = por %p50, %p51
      %s53 = ssub.s32 %s19, %s26
      %p54 = scmp.eq.s32.totalorder %s53, 0
      %s56 = sadd.s32 %s55, 1
      %s57 = scalar_select %p54, %s55, %s56
      %p60 = pneg %p54
      %p61 = scmp.eq.s32.totalorder %s19, 1
      %p62 = por %p60, %p61
      %p63 = scmp.ne.s32.totalorder %s55, %s58
      %p64 = scmp.eq.s32.totalorder %s19, 0
      %p65 = por %p63, %p64
      %p66 = scmp.ne.s32.totalorder %s55, %s58
      %p67 = scmp.eq.s32.totalorder %s24, 1
      %p68 = por %p66, %p67
      %p69 = scmp.ne.s32.totalorder %s58, %s59
      %p70 = scmp.eq.s32.totalorder %s24, 0
      %p71 = por %p69, %p70
      %p72 = scmp.ne.s32.totalorder %s58, %s59
      %p73 = scmp.eq.s32.totalorder %s25, 1
      %p74 = por %p72, %p73
      %p76 = scmp.ne.s32.totalorder %s59, %s75
      %p77 = scmp.eq.s32.totalorder %s25, 0
      %p78 = por %p76, %p77
      %s80 = sadd.s32 %s79, 1
      %p83 = scmp.eq.s32.totalorder %s19, 1
      %p84 = scmp.ne.s32.totalorder %s79, %s81
      %p85 = scmp.eq.s32.totalorder %s19, 0
      %p86 = por %p84, %p85
      %p87 = scmp.ne.s32.totalorder %s79, %s81
      %p88 = scmp.eq.s32.totalorder %s24, 1
      %p89 = por %p87, %p88
      %p90 = scmp.ne.s32.totalorder %s81, %s82
      %p91 = scmp.eq.s32.totalorder %s24, 0
      %p92 = por %p90, %p91
      %p93 = scmp.ne.s32.totalorder %s81, %s82
      %p94 = scmp.eq.s32.totalorder %s25, 1
      %p95 = por %p93, %p94
      %p97 = scmp.ne.s32.totalorder %s82, %s96
      %p98 = scmp.eq.s32.totalorder %s25, 0
      %p99 = por %p97, %p98
      %s101 = sadd.s32 %s100, 1
      %p104 = scmp.eq.s32.totalorder %s19, 1
      %p105 = scmp.ne.s32.totalorder %s100, %s102
      %p106 = scmp.eq.s32.totalorder %s19, 0
      %p107 = por %p105, %p106
      %p108 = scmp.ne.s32.totalorder %s100, %s102
      %p109 = scmp.eq.s32.totalorder %s24, 1
      %p110 = por %p108, %p109
      %p111 = scmp.ne.s32.totalorder %s102, %s103
      %p112 = scmp.eq.s32.totalorder %s24, 0
      %p113 = por %p111, %p112
      %p114 = scmp.ne.s32.totalorder %s102, %s103
      %p115 = scmp.eq.s32.totalorder %s25, 1
      %p116 = por %p114, %p115
      %p118 = scmp.ne.s32.totalorder %s103, %s117
      %p119 = scmp.eq.s32.totalorder %s25, 0
      %p120 = por %p118, %p119
      %s121 = ssub.s32 %s19, %s26
      %p122 = scmp.eq.s32.totalorder %s121, 0
      %s124 = sadd.s32 %s123, 1
      %s125 = scalar_select %p122, %s123, %s124
      %p128 = pneg %p122
      %p129 = scmp.eq.s32.totalorder %s19, 1
      %p130 = por %p128, %p129
      %p131 = scmp.ne.s32.totalorder %s123, %s126
      %p132 = scmp.eq.s32.totalorder %s19, 0
      %p133 = por %p131, %p132
      %p134 = scmp.ne.s32.totalorder %s123, %s126
      %p135 = scmp.eq.s32.totalorder %s24, 1
      %p136 = por %p134, %p135
      %p137 = scmp.ne.s32.totalorder %s126, %s127
      %p138 = scmp.eq.s32.totalorder %s24, 0
      %p139 = por %p137, %p138
      %p140 = scmp.ne.s32.totalorder %s126, %s127
      %p141 = scmp.eq.s32.totalorder %s25, 1
      %p142 = por %p140, %p141
      %p144 = scmp.ne.s32.totalorder %s127, %s143
      %p145 = scmp.eq.s32.totalorder %s25, 0
      %p146 = por %p144, %p145
      %p147 = scmp.le.s32.totalorder 1, %s19
      %p148 = scmp.lt.s32.totalorder %s19, 3
      %p149 = pnand %p147, %p148
      %p150 = pneg %p149
      // Predicated region
      $region9: #{tpu_custom_call.1} parent=5 // pred_check
        _
      $region10: #{tpu_custom_call.1} parent=5 // pred_check_branch
        %152 = sbr.rel (%p149) target = $region12
      $region11: #{tpu_custom_call.1} parent=5 // pred_region
        %s153 = ssub.s32 %s19, 1
        // Predicated region
        $region13: #{tpu_custom_call.1} parent=11 // pred_check
          %p154 = pneg %p92
        $region14: #{tpu_custom_call.1} parent=11 // pred_check_branch
          %156 = sbr.rel (%p154) target = $region16
        $region15: #{tpu_custom_call.1} parent=11 // pred_region
          _
        $region16: #{tpu_custom_call.1} parent=11 // pred_fallthru
          _
        // Predicated region
        $region17: #{tpu_custom_call.1} parent=11 // pred_check
          %p157 = pneg %p113
        $region18: #{tpu_custom_call.1} parent=11 // pred_check_branch
          %159 = sbr.rel (%p157) target = $region20
        $region19: #{tpu_custom_call.1} parent=11 // pred_region
          _
        $region20: #{tpu_custom_call.1} parent=11 // pred_fallthru
          _
      $region12: #{tpu_custom_call.1} parent=5 // pred_fallthru
        _
      %p160 = scmp.lt.s32.totalorder %s19, 2
      // Predicated region
      $region21: #{tpu_custom_call.1} parent=5 // pred_check
        %p161 = pneg %p160
      $region22: #{tpu_custom_call.1} parent=5 // pred_check_branch
        %163 = sbr.rel (%p161) target = $region24
      $region23: #{tpu_custom_call.1} parent=5 // pred_region
        // Predicated region
        $region25: #{tpu_custom_call.1} parent=23 // pred_check
          %p164 = pneg %p39
        $region26: #{tpu_custom_call.1} parent=23 // pred_check_branch
          %166 = sbr.rel (%p164) target = $region28
        $region27: #{tpu_custom_call.1} parent=23 // pred_region
          %s167 = sand.u32 %s29, 1
          %s168 = scalar_lea.sflag [#allocation3], %s167
          %s169 = sand.u32 %s29, 1
          %s170 = smul.addr %s169, 8
          %s171 = scalar_lea.vmem [#allocation2], %s170
          %s173 = ssub.s32 128, 128
          %174 = vsyncadd %s168, %s173
          %s175 = smul.addr %s19, 128
          %s176 = scalar_lea.hbm %s0, %s175
          %s178 = sshll.u32 %s171, 4
          %s179 = int_to_ptr.vmem [resolvable:$true] %s178
          %181 = dma.hbm_to_vmem [thread:$0]  %s176, 128, %s179, %s168
        $region28: #{tpu_custom_call.1} parent=23 // pred_fallthru
          _
        // Predicated region
        $region29: #{tpu_custom_call.1} parent=23 // pred_check
          %p182 = pneg %p65
        $region30: #{tpu_custom_call.1} parent=23 // pred_check_branch
          %184 = sbr.rel (%p182) target = $region32
        $region31: #{tpu_custom_call.1} parent=23 // pred_region
          %s185 = sand.u32 %s55, 1
          %s186 = scalar_lea.sflag [#allocation6], %s185
          %s187 = sand.u32 %s55, 1
          %s188 = smul.addr %s187, 8
          %s189 = scalar_lea.vmem [#allocation5], %s188
          %s191 = ssub.s32 128, 128
          %192 = vsyncadd %s186, %s191
          %s193 = smul.addr %s19, 128
          %s194 = scalar_lea.hbm %s1, %s193
          %s196 = sshll.u32 %s189, 4
          %s197 = int_to_ptr.vmem [resolvable:$true] %s196
          %199 = dma.hbm_to_vmem [thread:$0]  %s194, 128, %s197, %s186
        $region32: #{tpu_custom_call.1} parent=23 // pred_fallthru
          _
      $region24: #{tpu_custom_call.1} parent=5 // pred_fallthru
        _
      %p200 = scmp.le.s32.totalorder 1, %s19
      %p201 = scmp.lt.s32.totalorder %s19, 3
      %p202 = pnand %p200, %p201
      %p203 = pneg %p202
      // Predicated region
      $region33: #{tpu_custom_call.1} parent=5 // pred_check
        _
      $region34: #{tpu_custom_call.1} parent=5 // pred_check_branch
        %205 = sbr.rel (%p202) target = $region36
      $region35: #{tpu_custom_call.1} parent=5 // pred_region
        %s206 = ssub.s32 %s19, 1
        %s207 = sand.u32 %s32, 1
        %s208 = scalar_lea.sflag [#allocation3], %s207
        %s209 = sand.u32 %s32, 1
        %s210 = smul.addr %s209, 8
        %s211 = scalar_lea.vmem [#allocation2], %s210
        // Predicated region
        $region37: #{tpu_custom_call.1} parent=35 // pred_check
          %p212 = pneg %p45
        $region38: #{tpu_custom_call.1} parent=35 // pred_check_branch
          %214 = sbr.rel (%p212) target = $region40
        $region39: #{tpu_custom_call.1} parent=35 // pred_region
          %215 = dma.done %s208, 128
        $region40: #{tpu_custom_call.1} parent=35 // pred_fallthru
          _
        %s216 = sand.u32 %s58, 1
        %s217 = scalar_lea.sflag [#allocation6], %s216
        %s218 = sand.u32 %s58, 1
        %s219 = smul.addr %s218, 8
        %s220 = scalar_lea.vmem [#allocation5], %s219
        // Predicated region
        $region41: #{tpu_custom_call.1} parent=35 // pred_check
          %p221 = pneg %p71
        $region42: #{tpu_custom_call.1} parent=35 // pred_check_branch
          %223 = sbr.rel (%p221) target = $region44
        $region43: #{tpu_custom_call.1} parent=35 // pred_region
          %224 = dma.done %s217, 128
        $region44: #{tpu_custom_call.1} parent=35 // pred_fallthru
          _
        %s225 = sand.u32 %s32, 1
        %s226 = scalar_lea.sflag [#allocation3], %s225
        %s227 = sand.u32 %s32, 1
        %s228 = smul.addr %s227, 8
        %s229 = scalar_lea.vmem [#allocation2], %s228
        %p230 = pneg %p45
        %p231 = pneg %p42
        %s232 = sand.u32 %s58, 1
        %s233 = scalar_lea.sflag [#allocation6], %s232
        %s234 = sand.u32 %s58, 1
        %s235 = smul.addr %s234, 8
        %s236 = scalar_lea.vmem [#allocation5], %s235
        %p237 = pneg %p71
        %p238 = pneg %p68
        %p239 = pneg %p92
        %p240 = pneg %p89
        %p241 = pneg %p113
        %p242 = pneg %p110
        %p243 = pneg %p139
        %p244 = pneg %p136
        %s245 = sand.u32 %s126, 1
        %s246 = scalar_lea.sflag [#allocation4], %s245
        %s247 = sand.u32 %s126, 1
        %s248 = smul.addr %s247, 8
        %s249 = scalar_lea.vmem [#allocation7], %s248
        %v250 = vld [vmem:[%s211] sm:$0xff]
        %v251 = vld [vmem:[%s220] sm:$0xff]
        %v252 = vadd.f32 %v251, %v250
        %253 = vadd.xlane.f32.xlu0 %v252
        %v254 = vpop.xlane.xlu0 %253
        %v255 = vrcp.pop 128.0
        %v256 = vmul.f32 %v254, %v255
        %v257 = vsub.f32 %v252, %v256
        %v258 = vmul.f32 %v257, %v257
        %259 = vadd.xlane.f32.xlu0 %v258
        %v260 = vpop.xlane.xlu0 %259
        %v261 = vmul.f32 %v260, %v255
        %v262 = vadd.f32 %v261, 1e-05
        %v263 = vrsqrt.pop %v262
        %v264 = vld [vmem:[%s2] sm:$0x1]
        %v265 = vld [vmem:[%s3] sm:$0x1]
        %v266 = vmul.f32 %v257, %v263
        %v268 = vlaneseq
        %v269 = vshrl.u32 %v268, 7
        %v270 = vsub.s32 0, %v269
        %v271 = vrot.slane %v264, %v270
        %v273 = vmul.f32 %v266, %v271
        %v275 = vlaneseq
        %v276 = vshrl.u32 %v275, 7
        %v277 = vsub.s32 0, %v276
        %v278 = vrot.slane %v265, %v277
        %v280 = vadd.f32 %v273, %v278
        %281 = vst [vmem:[%s249] sm:$0xff] %v280
        %s282 = sand.u32 %s126, 1
        %s283 = scalar_lea.sflag [#allocation4], %s282
        %s284 = sand.u32 %s126, 1
        %s285 = smul.addr %s284, 8
        %s286 = scalar_lea.vmem [#allocation7], %s285
        // Predicated region
        $region45: #{tpu_custom_call.1} parent=35 // pred_check
          %p287 = pneg %p136
        $region46: #{tpu_custom_call.1} parent=35 // pred_check_branch
          %289 = sbr.rel (%p287) target = $region48
        $region47: #{tpu_custom_call.1} parent=35 // pred_region
          %s291 = ssub.s32 128, 128
          %292 = vsyncadd %s283, %s291
          %s293 = smul.addr %s24, 128
          %s294 = scalar_lea.hbm %s4, %s293
          %s296 = sshll.u32 %s286, 4
          %s297 = int_to_ptr.vmem [resolvable:$true] %s296
          %299 = dma.vmem_to_hbm [thread:$0]  %s297, 128, %s294, %s283
        $region48: #{tpu_custom_call.1} parent=35 // pred_fallthru
          _
      $region36: #{tpu_custom_call.1} parent=5 // pred_fallthru
        _
      %p300 = scmp.le.s32.totalorder 2, %s19
      // Predicated region
      $region49: #{tpu_custom_call.1} parent=5 // pred_check
        %p301 = pneg %p300
      $region50: #{tpu_custom_call.1} parent=5 // pred_check_branch
        %303 = sbr.rel (%p301) target = $region52
      $region51: #{tpu_custom_call.1} parent=5 // pred_region
        %s304 = ssub.s32 %s19, 2
        // Predicated region
        $region53: #{tpu_custom_call.1} parent=51 // pred_check
          %p305 = pneg %p142
        $region54: #{tpu_custom_call.1} parent=51 // pred_check_branch
          %307 = sbr.rel (%p305) target = $region56
        $region55: #{tpu_custom_call.1} parent=51 // pred_region
          %s308 = sand.u32 %s127, 1
          %s309 = scalar_lea.sflag [#allocation4], %s308
          %s310 = sand.u32 %s127, 1
          %s311 = smul.addr %s310, 8
          %s312 = scalar_lea.vmem [#allocation7], %s311
          %313 = dma.done %s309, 128
        $region56: #{tpu_custom_call.1} parent=51 // pred_fallthru
          _
      $region52: #{tpu_custom_call.1} parent=5 // pred_fallthru
        _
    $region6: #{tpu_custom_call.1} parent=1 // loop_footer
      %s23 = sadd.s32 1, %s19
    $region7: #{tpu_custom_call.1} parent=1 // loop_footer_branch
      %18 = sbr.rel target = $region3
    $region8: #{tpu_custom_call.1} parent=1 // loop_exit
      _
    %314 = vsyncpa [#allocation3], 1
    %s315 = scalar_lea.sflag [#allocation3], 1
    %316 = vsyncpa %s315, 1
    %317 = vsyncpa [#allocation6], 1
    %s318 = scalar_lea.sflag [#allocation6], 1
    %319 = vsyncpa %s318, 1
    %320 = vsyncpa [#allocation4], 1
    %s321 = scalar_lea.sflag [#allocation4], 1
    %322 = vsyncpa %s321, 1

</llo_original>
